<compile_context>
chip_gen: v7x
topology: tpu7x:2x2x1
jax: 0.10.0
libtpu: 0.0.40
codegen_flags: <defaults>
</compile_context>

<pallas_src>
import functools

import jax
import jax.numpy as jnp
from jax.experimental import pallas as pl
from jax.experimental.pallas import tpu as pltpu


def _soft_entropy_kernel(inp_ref, tgt_ref, out_ref, acc_ref, *,
                         n_total, block_rows, blocks_per_chunk, needs_mask):
    """Grid = (parallel_chunk p, block_within_chunk j). Each step handles a
    (block_rows, C) row strip; per-row partials accumulate in VMEM scratch and
    are reduced/stored once per chunk on the last j."""
    p = pl.program_id(0)
    j = pl.program_id(1)

    @pl.when(j == 0)
    def _():
        acc_ref[...] = jnp.zeros_like(acc_ref)

    x = inp_ref[...].astype(jnp.float32)   # (tb, C)
    t = tgt_ref[...].astype(jnp.float32)   # (tb, C)

    # log_softmax(inputs) along classes (axis 1)
    x_max = jnp.max(x, axis=1, keepdims=True)
    x_sh = x - x_max
    lse = jnp.log(jnp.sum(jnp.exp(x_sh), axis=1, keepdims=True))
    log_probs = x_sh - lse                 # (tb, C)

    # softmax(targets) along classes (detach is a no-op in forward);
    # approx reciprocal -> EUP slot, off the VALU path.
    t_max = jnp.max(t, axis=1, keepdims=True)
    t_exp = jnp.exp(t - t_max)
    t_soft = t_exp * pl.reciprocal(jnp.sum(t_exp, axis=1, keepdims=True),
                                   approx=True)

    # per-row partial sums of (-p * log q); keep as (tb, 1), no scalar collapse
    row_sums = jnp.sum(-t_soft * log_probs, axis=1, keepdims=True)   # (tb, 1)

    if needs_mask:
        # rows >= n_total are zero-padding added by the wrapper -> contribute 0
        row0 = (p * blocks_per_chunk + j) * block_rows
        rows = row0 + jax.lax.broadcasted_iota(jnp.int32, row_sums.shape, 0)
        row_sums = jnp.where(rows < n_total, row_sums, 0.0)

    acc_ref[...] += row_sums

    @pl.when(j == pl.num_programs(1) - 1)
    def _():
        # one cross-sublane reduce per chunk; raw sum (divide by N in wrapper).
        chunk_sum = jnp.sum(acc_ref[...])
        # lane-dense full-block store; wrapper reads element [p, 0, 0].
        out_ref[...] = jnp.full(out_ref.shape, chunk_sum, jnp.float32)


def soft_entropy(inputs, targets, *, block_rows=None, num_parallel_chunks=2,
                 vmem_limit_bytes=32 * 1024 * 1024):
    """Pallas implementation of SoftEntropy.forward for (N, C) inputs."""
    assert inputs.shape == targets.shape and inputs.ndim == 2
    n, c = inputs.shape
    itemsize = inputs.dtype.itemsize

    if block_rows is None:
        # 2 operands x 2 pipeline buffers of (tb, C) plus the (tb, 1) f32
        # accumulator (lane-padded to 128) must fit a conservative VMEM
        # budget that is safe on every generation, incl. v7x's 64 MiB.
        budget = 20 * 1024 * 1024
        bytes_per_row = 4 * c * itemsize + 128 * 4
        block_rows = budget // bytes_per_row
        block_rows = min(block_rows, 1024)
    block_rows = max(8, (block_rows // 8) * 8)
    # never pick a tile taller than the (sublane-padded) batch
    block_rows = min(block_rows, pl.cdiv(n, 8) * 8)

    n_blocks = pl.cdiv(n, block_rows)
    num_par = max(1, min(num_parallel_chunks, n_blocks))   # megacore on v7x
    blocks_per_chunk = pl.cdiv(n_blocks, num_par)
    total_blocks = num_par * blocks_per_chunk
    padded_n = total_blocks * block_rows

    needs_mask = padded_n != n
    if needs_mask:
        pad = padded_n - n
        inputs = jnp.pad(inputs, ((0, pad), (0, 0)))
        targets = jnp.pad(targets, ((0, pad), (0, 0)))

    # TODO(synk): for vocab-scale C, additionally block the class dimension
    # with an online (streaming max / LSE) formulation; for C << 128, lanes
    # are under-utilized and multiple problems could be lane-packed per call.

    kernel = functools.partial(
        _soft_entropy_kernel,
        n_total=n, block_rows=block_rows,
        blocks_per_chunk=blocks_per_chunk, needs_mask=needs_mask)

    in_map = lambda p, j: (p * blocks_per_chunk + j, 0)

    out = pl.pallas_call(
        kernel,
        out_shape=jax.ShapeDtypeStruct((num_par, 8, 128), jnp.float32),
        grid_spec=pltpu.PrefetchScalarGridSpec(
            num_scalar_prefetch=0,
            grid=(num_par, blocks_per_chunk),
            in_specs=[
                pl.BlockSpec((block_rows, c), in_map),
                pl.BlockSpec((block_rows, c), in_map),
            ],
            # one (8,128) partial-sum tile per parallel chunk -> no shared
            # accumulator race when the outer axis is parallel (v7x megacore)
            out_specs=pl.BlockSpec((1, 8, 128), lambda p, j: (p, 0, 0)),
            scratch_shapes=[pltpu.VMEM((block_rows, 1), jnp.float32)],
        ),
        compiler_params=pltpu.CompilerParams(
            dimension_semantics=("parallel", "arbitrary"),
            vmem_limit_bytes=vmem_limit_bytes,
        ),
    )(inputs, targets)

    # single divide-by-N, once, in the wrapper
    return jnp.sum(out[:, 0, 0]) / jnp.float32(n)


def _reference(inputs, targets):
    log_probs = jax.nn.log_softmax(inputs.astype(jnp.float32), axis=1)
    p = jax.nn.softmax(targets.astype(jnp.float32), axis=1)
    return jnp.sum(jnp.mean(-p * log_probs, axis=0))


if __name__ == "__main__":
    key = jax.random.PRNGKey(0)
    k1, k2, k3, k4 = jax.random.split(key, 4)

    # Case 1: small shape matching the module spec (N, C) = (8, 32)
    N, C = 8, 32
    inputs = jax.random.normal(k1, (N, C), dtype=jnp.float32)
    targets = jax.random.normal(k2, (N, C), dtype=jnp.float32)
    loss = jax.block_until_ready(soft_entropy(inputs, targets))
    ref = _reference(inputs, targets)
    # tolerance loosened slightly for the approx (EUP) reciprocal
    assert jnp.allclose(loss, ref, rtol=5e-3, atol=5e-3), (loss, ref)

    # Case 2: ragged batch + multi-block + parallel-chunk path
    N2, C2 = 40, 128
    inputs2 = jax.random.normal(k3, (N2, C2), dtype=jnp.float32)
    targets2 = jax.random.normal(k4, (N2, C2), dtype=jnp.float32)
    loss2 = jax.block_until_ready(
        soft_entropy(inputs2, targets2, block_rows=8))
    ref2 = _reference(inputs2, targets2)
    assert jnp.allclose(loss2, ref2, rtol=5e-3, atol=5e-3), (loss2, ref2)

    print("KERNEL_OK")
</pallas_src>

<mosaic_0001>
module attributes {stable_mosaic.version = 11 : i64} {
  func.func @_soft_entropy_kernel(%arg0: i32, %arg1: i32, %arg2: memref<8x32xf32, #tpu.memory_space<vmem>>, %arg3: memref<8x32xf32, #tpu.memory_space<vmem>>, %arg4: memref<1x8x128xf32, #tpu.memory_space<vmem>>, %arg5: memref<8x1xf32, #tpu.memory_space<vmem>>) attributes {dimension_semantics = [#tpu.dimension_semantics<parallel>, #tpu.dimension_semantics<arbitrary>], iteration_bounds = array<i64: 1, 1>, scalar_prefetch = 0 : i64, scratch_operands = 1 : i64, tpu.core_type = #tpu.core_type<tc>, window_params = [{transform_indices = @transform_0, window_bounds = array<i64: 8, 32>}, {transform_indices = @transform_1, window_bounds = array<i64: 8, 32>}, {transform_indices = @transform_2, window_bounds = array<i64: 1, 8, 128>}]} {
    %c0_i32 = arith.constant 0 : i32
    %0 = arith.cmpi eq, %arg1, %c0_i32 : i32
    %1 = arith.extui %0 : i1 to i32
    %c0_i32_0 = arith.constant 0 : i32
    %2 = arith.cmpi ne, %1, %c0_i32_0 : i32
    scf.if %2 {
      %cst_15 = arith.constant 0.000000e+00 : f32
      %36 = vector.broadcast %cst_15 : f32 to vector<8x1xf32>
      %c0_16 = arith.constant 0 : index
      %c0_17 = arith.constant 0 : index
      %37 = vector.load %arg5[%c0_16, %c0_17] : memref<8x1xf32, #tpu.memory_space<vmem>>, vector<8x1xf32>
      tpu.vector_store %arg5[%c0_16, %c0_17], %36 {strides = array<i32>} : memref<8x1xf32, #tpu.memory_space<vmem>>, vector<8x1xf32>,
    } else {
    }
    %c0 = arith.constant 0 : index
    %c0_1 = arith.constant 0 : index
    %3 = vector.load %arg2[%c0, %c0_1] : memref<8x32xf32, #tpu.memory_space<vmem>>, vector<8x32xf32>
    %c0_2 = arith.constant 0 : index
    %c0_3 = arith.constant 0 : index
    %4 = vector.load %arg3[%c0_2, %c0_3] : memref<8x32xf32, #tpu.memory_space<vmem>>, vector<8x32xf32>
    %cst = arith.constant dense<0xFF800000> : vector<8xf32>
    %5 = vector.multi_reduction <maximumf>, %3, %cst [1] : vector<8x32xf32> to vector<8xf32>
    %6 = vector.shape_cast %5 : vector<8xf32> to vector<8x1xf32>
    %7 = vector.broadcast %6 : vector<8x1xf32> to vector<8x32xf32>
    %8 = arith.subf %3, %7 : vector<8x32xf32>
    %9 = math.exp %8 : vector<8x32xf32>
    %cst_4 = arith.constant dense<0.000000e+00> : vector<8xf32>
    %10 = vector.multi_reduction <add>, %9, %cst_4 [1] : vector<8x32xf32> to vector<8xf32>
    %11 = vector.shape_cast %10 : vector<8xf32> to vector<8x1xf32>
    %12 = math.log %11 : vector<8x1xf32>
    %13 = vector.broadcast %12 : vector<8x1xf32> to vector<8x32xf32>
    %14 = arith.subf %8, %13 : vector<8x32xf32>
    %cst_5 = arith.constant dense<0xFF800000> : vector<8xf32>
    %15 = vector.multi_reduction <maximumf>, %4, %cst_5 [1] : vector<8x32xf32> to vector<8xf32>
    %16 = vector.shape_cast %15 : vector<8xf32> to vector<8x1xf32>
    %17 = vector.broadcast %16 : vector<8x1xf32> to vector<8x32xf32>
    %18 = arith.subf %4, %17 : vector<8x32xf32>
    %19 = math.exp %18 : vector<8x32xf32>
    %cst_6 = arith.constant dense<0.000000e+00> : vector<8xf32>
    %20 = vector.multi_reduction <add>, %19, %cst_6 [1] : vector<8x32xf32> to vector<8xf32>
    %21 = vector.shape_cast %20 : vector<8xf32> to vector<8x1xf32>
    %22 = tpu.reciprocal %21 {approx = true} : vector<8x1xf32> -> vector<8x1xf32>
    %23 = vector.broadcast %22 : vector<8x1xf32> to vector<8x32xf32>
    %24 = arith.mulf %19, %23 : vector<8x32xf32>
    %cst_7 = arith.constant 0.000000e+00 : f32
    %25 = vector.broadcast %cst_7 : f32 to vector<8x32xf32>
    %26 = arith.subf %25, %24 : vector<8x32xf32>
    %27 = arith.mulf %26, %14 : vector<8x32xf32>
    %cst_8 = arith.constant dense<0.000000e+00> : vector<8xf32>
    %28 = vector.multi_reduction <add>, %27, %cst_8 [1] : vector<8x32xf32> to vector<8xf32>
    %29 = vector.shape_cast %28 : vector<8xf32> to vector<8x1xf32>
    %c0_9 = arith.constant 0 : index
    %c0_10 = arith.constant 0 : index
    %30 = vector.load %arg5[%c0_9, %c0_10] : memref<8x1xf32, #tpu.memory_space<vmem>>, vector<8x1xf32>
    %31 = arith.addf %30, %29 : vector<8x1xf32>
    %c0_11 = arith.constant 0 : index
    %c0_12 = arith.constant 0 : index
    %32 = vector.load %arg5[%c0_11, %c0_12] : memref<8x1xf32, #tpu.memory_space<vmem>>, vector<8x1xf32>
    tpu.vector_store %arg5[%c0_11, %c0_12], %31 {strides = array<i32>} : memref<8x1xf32, #tpu.memory_space<vmem>>, vector<8x1xf32>,
    %c0_i32_13 = arith.constant 0 : i32
    %33 = arith.cmpi eq, %arg1, %c0_i32_13 : i32
    %34 = arith.extui %33 : i1 to i32
    %c0_i32_14 = arith.constant 0 : i32
    %35 = arith.cmpi ne, %34, %c0_i32_14 : i32
    scf.if %35 {
      %c0_15 = arith.constant 0 : index
      %c0_16 = arith.constant 0 : index
      %36 = vector.load %arg5[%c0_15, %c0_16] : memref<8x1xf32, #tpu.memory_space<vmem>>, vector<8x1xf32>
      %37 = vector.shape_cast %36 : vector<8x1xf32> to vector<1x8x1xf32>
      %cst_17 = arith.constant dense<0.000000e+00> : vector<1xf32>
      %38 = vector.multi_reduction <add>, %37, %cst_17 [1, 2] : vector<1x8x1xf32> to vector<1xf32>
      %39 = vector.shape_cast %38 : vector<1xf32> to vector<1x1x1xf32>
      %40 = vector.extract %39[0, 0, 0] : f32 from vector<1x1x1xf32>
      %41 = vector.broadcast %40 : f32 to vector<1x8x128xf32>
      %c0_18 = arith.constant 0 : index
      %c0_19 = arith.constant 0 : index
      %c0_20 = arith.constant 0 : index
      %42 = vector.load %arg4[%c0_18, %c0_19, %c0_20] : memref<1x8x128xf32, #tpu.memory_space<vmem>>, vector<1x8x128xf32>
      tpu.vector_store %arg4[%c0_18, %c0_19, %c0_20], %41 {strides = array<i32>} : memref<1x8x128xf32, #tpu.memory_space<vmem>>, vector<1x8x128xf32>,
    } else {
    }
    return
  }
  func.func @transform_0(%arg0: i32, %arg1: i32) -> (i32, i32) {
    %c1_i32 = arith.constant 1 : i32
    %0 = arith.muli %arg0, %c1_i32 : i32
    %1 = arith.addi %0, %arg1 : i32
    %c0_i32 = arith.constant 0 : i32
    %c0_i32_0 = arith.constant 0 : i32
    return %1, %c0_i32 : i32, i32
  }
  func.func @transform_1(%arg0: i32, %arg1: i32) -> (i32, i32) {
    %c1_i32 = arith.constant 1 : i32
    %0 = arith.muli %arg0, %c1_i32 : i32
    %1 = arith.addi %0, %arg1 : i32
    %c0_i32 = arith.constant 0 : i32
    %c0_i32_0 = arith.constant 0 : i32
    return %1, %c0_i32 : i32, i32
  }
  func.func @transform_2(%arg0: i32, %arg1: i32) -> (i32, i32, i32) {
    %c0_i32 = arith.constant 0 : i32
    %c0_i32_0 = arith.constant 0 : i32
    %c0_i32_1 = arith.constant 0 : i32
    return %arg0, %c0_i32, %c0_i32_0 : i32, i32, i32
  }
}

</mosaic_0001>

<llo_original>
// kernel: tpu_custom_call.1
$region0: #{tpu_custom_call.1}
  #allocation0 [shape = 'u32[]', space=smem, size = 0x4, offset = 0x4, fixed_abs, tag = 'smem constant byte address 0x4 - core index']
  #allocation1 [shape = 'u32[144,128]{1,0:T(1,128)}', space=vmem, size = 0x12000, scoped, tag = 'internal scratch']
  #allocation2 [shape = 'f32[8,1]{1,0:T(8,128)}', space=vmem, size = 0x1000, scoped, tag = 'scratch operand']
  %s0 = inlined_call_operand.hbm [shape: f32[8,32], index: 0, kind: input, shape index: {}]
  %s1 = inlined_call_operand.hbm [shape: f32[8,32], index: 1, kind: input, shape index: {}]
  %s2 = inlined_call_operand.hbm [shape: f32[1,8,128], index: 2, kind: output, shape index: {}]
  %s3 = sld [smem:[#allocation0]]
  $region34: #{tpu_custom_call.1} parent=0
    _
  %s5 = ssub.s32 1, %s3
  %s6 = scalar_select 0, %s5, %s3
  $region1: #{tpu_custom_call.1} parent=0
    #allocation3 [shape = 'u8[4096]{0}', space=vmem, size = 0x1000, scoped, tag = 'input window, operand 0, single buffered']
    #allocation4 [shape = 's32[1]{0}', space=sflag, size = 0x4, scoped, tag = 'scoped memory for tpu_custom_call.1']
    #allocation5 [shape = 's32[1]{0}', space=sflag, size = 0x4, scoped, tag = 'scoped memory for tpu_custom_call.1']
    #allocation6 [shape = 'u8[4096]{0}', space=vmem, size = 0x1000, scoped, tag = 'input window, operand 1, single buffered']
    #allocation7 [shape = 's32[1]{0}', space=sflag, size = 0x4, scoped, tag = 'scoped memory for tpu_custom_call.1']
    #allocation8 [shape = 'u8[4096]{0}', space=vmem, size = 0x1000, scoped, tag = 'output window, operand 0, single buffered']
    %7 = vsyncpa [#allocation4], 0
    %8 = vsyncpa [#allocation7], 0
    %9 = vsyncpa [#allocation5], 0
    // Predicated region
    $region2: #{tpu_custom_call.1} parent=1 // pred_check
      _
    $region3: #{tpu_custom_call.1} parent=1 // pred_check_branch
      %11 = sbr.rel (0) target = $region5
    $region4: #{tpu_custom_call.1} parent=1 // pred_region
      %s12 = sadd.s32 0, 0
      %s14 = ssub.s32 128, 128
      %15 = vsyncadd [#allocation4], %s14
      %s16 = smul.addr %s12, 128
      %s17 = scalar_lea.hbm %s0, %s16
      %s19 = sshll.u32 [#allocation3], 4
      %s20 = int_to_ptr.vmem [resolvable:$true] %s19
      %22 = dma.hbm_to_vmem [thread:$0]  %s17, 128, %s20, [#allocation4]
    $region5: #{tpu_custom_call.1} parent=1 // pred_fallthru
      _
    // Predicated region
    $region6: #{tpu_custom_call.1} parent=1 // pred_check
      _
    $region7: #{tpu_custom_call.1} parent=1 // pred_check_branch
      %24 = sbr.rel (0) target = $region9
    $region8: #{tpu_custom_call.1} parent=1 // pred_region
      %s25 = sadd.s32 0, 0
      %s27 = ssub.s32 128, 128
      %28 = vsyncadd [#allocation7], %s27
      %s29 = smul.addr %s25, 128
      %s30 = scalar_lea.hbm %s1, %s29
      %s32 = sshll.u32 [#allocation6], 4
      %s33 = int_to_ptr.vmem [resolvable:$true] %s32
      %35 = dma.hbm_to_vmem [thread:$0]  %s30, 128, %s33, [#allocation7]
    $region9: #{tpu_custom_call.1} parent=1 // pred_fallthru
      _
    // Predicated region
    $region10: #{tpu_custom_call.1} parent=1 // pred_check
      _
    $region11: #{tpu_custom_call.1} parent=1 // pred_check_branch
      %37 = sbr.rel (0) target = $region13
    $region12: #{tpu_custom_call.1} parent=1 // pred_region
      %38 = dma.done [#allocation4], 128
    $region13: #{tpu_custom_call.1} parent=1 // pred_fallthru
      _
    // Predicated region
    $region14: #{tpu_custom_call.1} parent=1 // pred_check
      _
    $region15: #{tpu_custom_call.1} parent=1 // pred_check_branch
      %40 = sbr.rel (0) target = $region17
    $region16: #{tpu_custom_call.1} parent=1 // pred_region
      %41 = dma.done [#allocation7], 128
    $region17: #{tpu_custom_call.1} parent=1 // pred_fallthru
      _
    %s42 = sadd.s32 0, 0
    %s43 = sadd.s32 0, 0
    %p44 = scmp.eq.s32.totalorder 0, 0
    // Predicated region
    $region18: #{tpu_custom_call.1} parent=1 // pred_check
      %p45 = pneg %p44
    $region19: #{tpu_custom_call.1} parent=1 // pred_check_branch
      %47 = sbr.rel (%p45) target = $region21
    $region20: #{tpu_custom_call.1} parent=1 // pred_region
      %vm48 = vcmask 7168
      %49 = vst.msk [vmem:[#allocation2] sm:$0xff] %vm48, 0.0
    $region21: #{tpu_custom_call.1} parent=1 // pred_fallthru
      _
    %v50 = vld [vmem:[#allocation3] sm:$0xff]
    %v51 = vld [vmem:[#allocation6] sm:$0xff]
    %vm52 = vcmask 261120
    %v53 = vsel %vm52, %v50, -inf
    %54 = vmax.xlane.f32.xlu0 %v53
    %v55 = vpop.xlane.xlu0 %54
    %v56 = vsub.f32 %v50, %v55
    %v57 = vmul.f32 %v56, 1.442695
    %v58 = vpow.pop %v57
    %v59 = vsel %vm52, %v58, 0.0
    %60 = vadd.xlane.f32.xlu0 %v59
    %v61 = vpop.xlane.xlu0 %60
    %v62 = vlog2.pop %v61
    %v63 = vmul.f32 %v62, 0.6931472
    %v64 = vsub.f32 %v56, %v63
    %v65 = vsel %vm52, %v51, -inf
    %66 = vmax.xlane.f32.xlu0 %v65
    %v67 = vpop.xlane.xlu0 %66
    %v68 = vsub.f32 %v51, %v67
    %v69 = vmul.f32 %v68, 1.442695
    %v70 = vpow.pop %v69
    %v71 = vsel %vm52, %v70, 0.0
    %72 = vadd.xlane.f32.xlu0 %v71
    %v73 = vpop.xlane.xlu0 %72
    %v74 = vrcp.pop %v73
    %v75 = vmul.f32 %v70, %v74
    %v76 = vsub.f32 0.0, %v75
    %v77 = vmul.f32 %v76, %v64
    %v78 = vsel %vm52, %v77, 0.0
    %79 = vadd.xlane.f32.xlu0 %v78
    %v80 = vpop.xlane.xlu0 %79
    %v81 = vld [vmem:[#allocation2] sm:$0xff]
    %v82 = vadd.f32 %v81, %v80
    %vm83 = vcmask 7168
    %84 = vst.msk [vmem:[#allocation2] sm:$0xff] %vm83, %v82
    // Predicated region
    $region22: #{tpu_custom_call.1} parent=1 // pred_check
      %p85 = pneg %p44
    $region23: #{tpu_custom_call.1} parent=1 // pred_check_branch
      %87 = sbr.rel (%p85) target = $region25
    $region24: #{tpu_custom_call.1} parent=1 // pred_region
      %v88 = vld [vmem:[#allocation2] sm:$0xff]
      %v89 = vsel %vm83, %v88, 0.0
      %90 = vadd.xlane.f32.xlu0 %v89
      %v91 = vpop.xlane.xlu0 %90
      %v92 = vrot.slane %v91, 4
      %v93 = vadd.f32 %v91, %v92
      %v94 = vrot.slane %v93, 2
      %v95 = vadd.f32 %v93, %v94
      %v96 = vrot.slane %v95, 1
      %v97 = vadd.f32 %v95, %v96
      %s98 = vtos %v97
      %v99 = vstv %s98
      %100 = vst [vmem:[#allocation8] sm:$0xff] %v99
    $region25: #{tpu_custom_call.1} parent=1 // pred_fallthru
      _
    // Predicated region
    $region26: #{tpu_custom_call.1} parent=1 // pred_check
      _
    $region27: #{tpu_custom_call.1} parent=1 // pred_check_branch
      %102 = sbr.rel (0) target = $region29
    $region28: #{tpu_custom_call.1} parent=1 // pred_region
      %s104 = ssub.s32 128, 128
      %105 = vsyncadd [#allocation5], %s104
      %s107 = sshll.u32 [#allocation8], 4
      %s108 = int_to_ptr.vmem [resolvable:$true] %s107
      %110 = dma.vmem_to_hbm [thread:$0]  %s108, 128, %s2, [#allocation5]
    $region29: #{tpu_custom_call.1} parent=1 // pred_fallthru
      _
    // Predicated region
    $region30: #{tpu_custom_call.1} parent=1 // pred_check
      _
    $region31: #{tpu_custom_call.1} parent=1 // pred_check_branch
      %112 = sbr.rel (0) target = $region33
    $region32: #{tpu_custom_call.1} parent=1 // pred_region
      %113 = dma.done [#allocation5], 128
    $region33: #{tpu_custom_call.1} parent=1 // pred_fallthru
      _
    %114 = vsyncpa [#allocation4], 1
    %115 = vsyncpa [#allocation7], 1
    %116 = vsyncpa [#allocation5], 1

</llo_original>
